<compile_context>
chip_gen: v5e
topology: v5e:2x2
jax: 0.10.0
libtpu: 0.0.40
codegen_flags: <defaults>
</compile_context>

<pallas_src>
import jax
import jax.numpy as jnp
from jax.experimental import pallas as pl
from jax.experimental.pallas import tpu as pltpu


# ----------------------------------------------------------------------------
# Pallas kernel: whole DARTS cell, one launch.
# ----------------------------------------------------------------------------
def _make_cell_kernel(num_nodes, channels):
    C = channels

    def kernel(*refs):
        # refs = x, wpre, bpre, (w_d, b_d) * num_nodes, o_ref, buf_ref
        x_ref, wpre_ref, bpre_ref = refs[0], refs[1], refs[2]
        node_refs = refs[3:3 + 2 * num_nodes]
        o_ref = refs[3 + 2 * num_nodes]
        buf_ref = refs[4 + 2 * num_nodes]

        # ---- fused preproc0 + preproc1: relu -> one wide matmul -> + bias ----
        x = jnp.maximum(x_ref[...], 0.0).astype(jnp.bfloat16)          # ReLU (f32) then bf16
        t = jnp.dot(wpre_ref[...], x, preferred_element_type=jnp.float32)
        t = t + bpre_ref[...]                                          # folded BN shift
        # buffer stores the ReLU'd tensors (edge inputs); rows 0:2C = t0, t1
        buf_ref[0:2 * C, :] = jnp.maximum(t, 0.0)

        # ---- DARTS nodes: one wide-K matmul per node over all prev tensors ----
        for d in range(num_nodes):
            w_ref = node_refs[2 * d]        # (C, (d+2)*C)  bf16, scale+softmax folded
            b_ref = node_refs[2 * d + 1]    # (C, 1)        f32, sum of weighted shifts
            k = (d + 2) * C
            a = buf_ref[0:k, :].astype(jnp.bfloat16)
            y = jnp.dot(w_ref[...], a, preferred_element_type=jnp.float32)
            y = y + b_ref[...]
            o_ref[d * C:(d + 1) * C, :] = y                 # lane-dense output slice
            if d + 1 < num_nodes:                           # last node has no consumer
                buf_ref[(2 + d) * C:(3 + d) * C, :] = jnp.maximum(y, 0.0)

    return kernel


def _pick_tile_m(M):
    # Largest lane tile that divides M; capped so double-buffered tiles stay
    # well inside v7x's 64 MiB VMEM even at production channel counts.
    for t in (1024, 512, 256, 128):
        if M % t == 0:
            return t
    return M   # full-extent block (allowed when it equals the array dim)


def fused_cell(x_slab, wpre, bpre, node_ws, node_bs, num_nodes, channels):
    """x_slab: (Kin, M) f32; wpre: (2C, Kin) bf16; bpre: (2C, 1) f32;
    node_ws[d]: (C, (d+2)*C) bf16; node_bs[d]: (C, 1) f32.
    Returns (num_nodes*C, M) f32 = channel-concat of the node outputs."""
    C = channels
    Kin, M = x_slab.shape
    tile_m = _pick_tile_m(M)
    grid = (M // tile_m,)
    T = 2 + num_nodes

    in_specs = [
        pl.BlockSpec((Kin, tile_m), lambda i: (0, i)),
        pl.BlockSpec((2 * C, Kin), lambda i: (0, 0)),
        pl.BlockSpec((2 * C, 1), lambda i: (0, 0)),
    ]
    operands = [x_slab, wpre, bpre]
    for d in range(num_nodes):
        in_specs.append(pl.BlockSpec((C, (d + 2) * C), lambda i: (0, 0)))
        in_specs.append(pl.BlockSpec((C, 1), lambda i: (0, 0)))
        operands.append(node_ws[d])
        operands.append(node_bs[d])

    return pl.pallas_call(
        _make_cell_kernel(num_nodes, C),
        out_shape=jax.ShapeDtypeStruct((num_nodes * C, M), jnp.float32),
        grid_spec=pltpu.PrefetchScalarGridSpec(
            num_scalar_prefetch=0,
            grid=grid,
            in_specs=in_specs,
            out_specs=pl.BlockSpec((num_nodes * C, tile_m), lambda i: (0, i)),
            scratch_shapes=[pltpu.VMEM((T * C, tile_m), jnp.float32)],
        ),
        compiler_params=pltpu.CompilerParams(
            dimension_semantics=("parallel",)),
    )(*operands)


# ----------------------------------------------------------------------------
# Wrapper-side folding (BN scale / softmax edge weights baked into weights).
# ----------------------------------------------------------------------------
def _prepare_inputs(params, s0, s1):
    """NCHW inputs -> one channel-stacked (Kin, M) slab at the cell resolution."""
    N, _, H, W = s1.shape
    p0 = params['preproc0']
    if p0['kind'] == 'fr':
        # FactorizedReduce requires even spatial dims (torch.cat would fail otherwise).
        assert s0.shape[2] % 2 == 0 and s0.shape[3] % 2 == 0
        parts = [s0[:, :, ::2, ::2], s0[:, :, 1::2, 1::2], s1]
    else:
        parts = [s0, s1]
    slabs = [jnp.transpose(p, (1, 0, 2, 3)).reshape(p.shape[1], -1) for p in parts]
    return jnp.concatenate(slabs, axis=0), (N, H, W)


def _fold_cell(params, Cpp, Cprev):
    C = params['channels']
    p0, p1 = params['preproc0'], params['preproc1']

    if p0['kind'] == 'fr':
        Kin = 2 * Cpp + Cprev
        half = C // 2
        wpre = jnp.zeros((2 * C, Kin), jnp.float32)
        wpre = wpre.at[0:half, 0:Cpp].set(p0['w1'].T * p0['scale'][:half, None])
        wpre = wpre.at[half:C, Cpp:2 * Cpp].set(p0['w2'].T * p0['scale'][half:, None])
        wpre = wpre.at[C:2 * C, 2 * Cpp:].set(p1['w'].T * p1['scale'][:, None])
    else:
        Kin = Cpp + Cprev
        wpre = jnp.zeros((2 * C, Kin), jnp.float32)
        wpre = wpre.at[0:C, 0:Cpp].set(p0['w'].T * p0['scale'][:, None])
        wpre = wpre.at[C:2 * C, Cpp:].set(p1['w'].T * p1['scale'][:, None])
    bpre = jnp.concatenate([p0['shift'], p1['shift']])[:, None]         # (2C, 1)

    node_ws, node_bs = [], []
    for d, nd in enumerate(params['nodes']):
        E = d + 2
        a = jax.nn.softmax(nd['arch'])                                  # (E,)
        w_oi = jnp.transpose(nd['w'], (0, 2, 1))                        # (E, Cout, Cin)
        w_oi = w_oi * (a[:, None, None] * nd['scale'][:, :, None])      # fold a_e * scale_e
        wd = jnp.transpose(w_oi, (1, 0, 2)).reshape(C, E * C)           # (C, E*C)
        bd = jnp.sum(a[:, None] * nd['shift'], axis=0)[:, None]         # (C, 1)
        node_ws.append(wd.astype(jnp.bfloat16))
        node_bs.append(bd)
    return wpre.astype(jnp.bfloat16), bpre, node_ws, node_bs


def cell_forward(params, s0, s1):
    """s0, s1: NCHW float32.  Returns NCHW float32 (channels = num_nodes * C)."""
    C = params['channels']
    num_nodes = len(params['nodes'])
    Cpp, Cprev = s0.shape[1], s1.shape[1]
    x_slab, (N, H, W) = _prepare_inputs(params, s0, s1)
    wpre, bpre, node_ws, node_bs = _fold_cell(params, Cpp, Cprev)
    out = fused_cell(x_slab, wpre, bpre, node_ws, node_bs, num_nodes, C)
    out = out.reshape(num_nodes * C, N, H, W)
    return jnp.transpose(out, (1, 0, 2, 3))                             # -> NCHW


def cell_reference(params, s0, s1):
    """Pure-JAX reference using the same folded operands (bf16 matmul inputs,
    f32 accumulation), mirroring the kernel math exactly."""
    C = params['channels']
    num_nodes = len(params['nodes'])
    Cpp, Cprev = s0.shape[1], s1.shape[1]
    x_slab, (N, H, W) = _prepare_inputs(params, s0, s1)
    wpre, bpre, node_ws, node_bs = _fold_cell(params, Cpp, Cprev)

    x = jnp.maximum(x_slab, 0.0).astype(jnp.bfloat16)
    t = jnp.dot(wpre, x, preferred_element_type=jnp.float32) + bpre
    buf = jnp.maximum(t, 0.0)
    outs = []
    for d in range(num_nodes):
        y = jnp.dot(node_ws[d], buf.astype(jnp.bfloat16),
                    preferred_element_type=jnp.float32) + node_bs[d]
        outs.append(y)
        buf = jnp.concatenate([buf, jnp.maximum(y, 0.0)], axis=0)
    out = jnp.concatenate(outs, axis=0).reshape(num_nodes * C, N, H, W)
    return jnp.transpose(out, (1, 0, 2, 3))


# ----------------------------------------------------------------------------
# Deterministic parameter construction.
# ----------------------------------------------------------------------------
def _bn_fold(key, c, eps=1e-5):
    k1, k2, k3, k4 = jax.random.split(key, 4)
    gamma = 1.0 + 0.1 * jax.random.normal(k1, (c,), jnp.float32)
    beta = 0.1 * jax.random.normal(k2, (c,), jnp.float32)
    mean = 0.1 * jax.random.normal(k3, (c,), jnp.float32)
    var = 1.0 + 0.1 * jax.random.uniform(k4, (c,), jnp.float32)
    scale = gamma / jnp.sqrt(var + eps)
    shift = beta - mean * scale
    return scale, shift


def build_cell_params(key, num_nodes, channels, prev_channels,
                      prev_prev_channels, prev_reduction):
    keys = jax.random.split(key, 2 + num_nodes)
    params = {'channels': channels}

    if prev_reduction:
        k = jax.random.split(keys[0], 3)
        s, b = _bn_fold(k[2], channels)
        params['preproc0'] = dict(
            kind='fr',
            w1=0.1 * jax.random.normal(k[0], (prev_prev_channels, channels // 2), jnp.float32),
            w2=0.1 * jax.random.normal(k[1], (prev_prev_channels, channels // 2), jnp.float32),
            scale=s, shift=b)
    else:
        k = jax.random.split(keys[0], 2)
        s, b = _bn_fold(k[1], channels)
        params['preproc0'] = dict(
            kind='sc',
            w=0.1 * jax.random.normal(k[0], (prev_prev_channels, channels), jnp.float32),
            scale=s, shift=b)

    k = jax.random.split(keys[1], 2)
    s, b = _bn_fold(k[1], channels)
    params['preproc1'] = dict(
        kind='sc',
        w=0.1 * jax.random.normal(k[0], (prev_channels, channels), jnp.float32),
        scale=s, shift=b)

    nodes = []
    for d in range(num_nodes):
        E = d + 2
        kk = jax.random.split(keys[2 + d], 3)
        w = 0.1 * jax.random.normal(kk[0], (E, channels, channels), jnp.float32)
        bn_keys = jax.random.split(kk[1], E)
        folded = [_bn_fold(bk, channels) for bk in bn_keys]
        scales = jnp.stack([f[0] for f in folded])
        shifts = jnp.stack([f[1] for f in folded])
        arch = 0.1 * jax.random.normal(kk[2], (E,), jnp.float32)
        nodes.append(dict(w=w, scale=scales, shift=shifts, arch=arch))
    params['nodes'] = nodes
    return params


# ----------------------------------------------------------------------------
if __name__ == "__main__":
    key = jax.random.PRNGKey(0)
    num_nodes = 4
    channels = 8
    prev_channels = 8
    prev_prev_channels = 8
    N, H, W = 2, 8, 8            # s1 spatial; s0 is 2x larger (prev_reduction=True)

    kp, k0, k1 = jax.random.split(key, 3)
    params = build_cell_params(kp, num_nodes, channels, prev_channels,
                               prev_prev_channels, prev_reduction=True)

    s0 = jax.random.normal(k0, (N, prev_prev_channels, 2 * H, 2 * W), jnp.float32)
    s1 = jax.random.normal(k1, (N, prev_channels, H, W), jnp.float32)

    out = cell_forward(params, s0, s1)
    out = jax.block_until_ready(out)
    assert out.shape == (N, num_nodes * channels, H, W), out.shape
    assert bool(jnp.all(jnp.isfinite(out)))

    ref = jax.block_until_ready(cell_reference(params, s0, s1))
    assert jnp.allclose(out, ref, rtol=1e-3, atol=1e-3), \
        float(jnp.max(jnp.abs(out - ref)))

    print("KERNEL_OK")
</pallas_src>

<mosaic_0001>
module attributes {stable_mosaic.version = 11 : i64} {
  func.func @kernel(%arg0: i32, %arg1: memref<24x128xf32, #tpu.memory_space<vmem>>, %arg2: memref<16x24xbf16, #tpu.memory_space<vmem>>, %arg3: memref<16x1xf32, #tpu.memory_space<vmem>>, %arg4: memref<8x16xbf16, #tpu.memory_space<vmem>>, %arg5: memref<8x1xf32, #tpu.memory_space<vmem>>, %arg6: memref<8x24xbf16, #tpu.memory_space<vmem>>, %arg7: memref<8x1xf32, #tpu.memory_space<vmem>>, %arg8: memref<8x32xbf16, #tpu.memory_space<vmem>>, %arg9: memref<8x1xf32, #tpu.memory_space<vmem>>, %arg10: memref<8x40xbf16, #tpu.memory_space<vmem>>, %arg11: memref<8x1xf32, #tpu.memory_space<vmem>>, %arg12: memref<32x128xf32, #tpu.memory_space<vmem>>, %arg13: memref<48x128xf32, #tpu.memory_space<vmem>>) attributes {dimension_semantics = [#tpu.dimension_semantics<parallel>], iteration_bounds = array<i64: 1>, scalar_prefetch = 0 : i64, scratch_operands = 1 : i64, tpu.core_type = #tpu.core_type<tc>, window_params = [{transform_indices = @transform_0, window_bounds = array<i64: 24, 128>}, {pipeline_mode = #tpu.pipeline_mode<synchronous>, transform_indices = @transform_1, window_bounds = array<i64: 16, 24>}, {pipeline_mode = #tpu.pipeline_mode<synchronous>, transform_indices = @transform_2, window_bounds = array<i64: 16, 1>}, {pipeline_mode = #tpu.pipeline_mode<synchronous>, transform_indices = @transform_3, window_bounds = array<i64: 8, 16>}, {pipeline_mode = #tpu.pipeline_mode<synchronous>, transform_indices = @transform_4, window_bounds = array<i64: 8, 1>}, {pipeline_mode = #tpu.pipeline_mode<synchronous>, transform_indices = @transform_5, window_bounds = array<i64: 8, 24>}, {pipeline_mode = #tpu.pipeline_mode<synchronous>, transform_indices = @transform_6, window_bounds = array<i64: 8, 1>}, {pipeline_mode = #tpu.pipeline_mode<synchronous>, transform_indices = @transform_7, window_bounds = array<i64: 8, 32>}, {pipeline_mode = #tpu.pipeline_mode<synchronous>, transform_indices = @transform_8, window_bounds = array<i64: 8, 1>}, {pipeline_mode = #tpu.pipeline_mode<synchronous>, transform_indices = @transform_9, window_bounds = array<i64: 8, 40>}, {pipeline_mode = #tpu.pipeline_mode<synchronous>, transform_indices = @transform_10, window_bounds = array<i64: 8, 1>}, {transform_indices = @transform_11, window_bounds = array<i64: 32, 128>}]} {
    %c0 = arith.constant 0 : index
    %c0_0 = arith.constant 0 : index
    %0 = vector.load %arg1[%c0, %c0_0] : memref<24x128xf32, #tpu.memory_space<vmem>>, vector<24x128xf32>
    %cst = arith.constant 0.000000e+00 : f32
    %1 = vector.broadcast %cst : f32 to vector<24x128xf32>
    %2 = arith.maximumf %0, %1 : vector<24x128xf32>
    %3 = arith.truncf %2 : vector<24x128xf32> to vector<24x128xbf16>
    %c0_1 = arith.constant 0 : index
    %c0_2 = arith.constant 0 : index
    %4 = vector.load %arg2[%c0_1, %c0_2] : memref<16x24xbf16, #tpu.memory_space<vmem>>, vector<16x24xbf16>
    %cst_3 = arith.constant dense<0.000000e+00> : vector<16x128xf32>
    %5 = tpu.matmul %4, %3, %cst_3 {dimension_numbers = #tpu.dot_dimension_numbers<[1], [0], [0], [1], [0, 0, 1, 1], [], []>} : vector<16x24xbf16>, vector<24x128xbf16>, vector<16x128xf32> -> vector<16x128xf32>
    %c0_4 = arith.constant 0 : index
    %c0_5 = arith.constant 0 : index
    %6 = vector.load %arg3[%c0_4, %c0_5] : memref<16x1xf32, #tpu.memory_space<vmem>>, vector<16x1xf32>
    %7 = vector.broadcast %6 : vector<16x1xf32> to vector<16x128xf32>
    %8 = arith.addf %5, %7 : vector<16x128xf32>
    %cst_6 = arith.constant 0.000000e+00 : f32
    %9 = vector.broadcast %cst_6 : f32 to vector<16x128xf32>
    %10 = arith.maximumf %8, %9 : vector<16x128xf32>
    %c0_7 = arith.constant 0 : index
    %c0_8 = arith.constant 0 : index
    %11 = vector.load %arg13[%c0_7, %c0_8] : memref<48x128xf32, #tpu.memory_space<vmem>>, vector<16x128xf32>
    tpu.vector_store %arg13[%c0_7, %c0_8], %10 {strides = array<i32>} : memref<48x128xf32, #tpu.memory_space<vmem>>, vector<16x128xf32>,
    %c0_9 = arith.constant 0 : index
    %c0_10 = arith.constant 0 : index
    %12 = vector.load %arg13[%c0_9, %c0_10] : memref<48x128xf32, #tpu.memory_space<vmem>>, vector<16x128xf32>
    %13 = arith.truncf %12 : vector<16x128xf32> to vector<16x128xbf16>
    %c0_11 = arith.constant 0 : index
    %c0_12 = arith.constant 0 : index
    %14 = vector.load %arg4[%c0_11, %c0_12] : memref<8x16xbf16, #tpu.memory_space<vmem>>, vector<8x16xbf16>
    %cst_13 = arith.constant dense<0.000000e+00> : vector<8x128xf32>
    %15 = tpu.matmul %14, %13, %cst_13 {dimension_numbers = #tpu.dot_dimension_numbers<[1], [0], [0], [1], [0, 0, 1, 1], [], []>} : vector<8x16xbf16>, vector<16x128xbf16>, vector<8x128xf32> -> vector<8x128xf32>
    %c0_14 = arith.constant 0 : index
    %c0_15 = arith.constant 0 : index
    %16 = vector.load %arg5[%c0_14, %c0_15] : memref<8x1xf32, #tpu.memory_space<vmem>>, vector<8x1xf32>
    %17 = vector.broadcast %16 : vector<8x1xf32> to vector<8x128xf32>
    %18 = arith.addf %15, %17 : vector<8x128xf32>
    %c0_16 = arith.constant 0 : index
    %c0_17 = arith.constant 0 : index
    %19 = vector.load %arg12[%c0_16, %c0_17] : memref<32x128xf32, #tpu.memory_space<vmem>>, vector<8x128xf32>
    tpu.vector_store %arg12[%c0_16, %c0_17], %18 {strides = array<i32>} : memref<32x128xf32, #tpu.memory_space<vmem>>, vector<8x128xf32>,
    %cst_18 = arith.constant 0.000000e+00 : f32
    %20 = vector.broadcast %cst_18 : f32 to vector<8x128xf32>
    %21 = arith.maximumf %18, %20 : vector<8x128xf32>
    %c16 = arith.constant 16 : index
    %c0_19 = arith.constant 0 : index
    %22 = vector.load %arg13[%c16, %c0_19] : memref<48x128xf32, #tpu.memory_space<vmem>>, vector<8x128xf32>
    tpu.vector_store %arg13[%c16, %c0_19], %21 {strides = array<i32>} : memref<48x128xf32, #tpu.memory_space<vmem>>, vector<8x128xf32>,
    %c0_20 = arith.constant 0 : index
    %c0_21 = arith.constant 0 : index
    %23 = vector.load %arg13[%c0_20, %c0_21] : memref<48x128xf32, #tpu.memory_space<vmem>>, vector<24x128xf32>
    %24 = arith.truncf %23 : vector<24x128xf32> to vector<24x128xbf16>
    %c0_22 = arith.constant 0 : index
    %c0_23 = arith.constant 0 : index
    %25 = vector.load %arg6[%c0_22, %c0_23] : memref<8x24xbf16, #tpu.memory_space<vmem>>, vector<8x24xbf16>
    %cst_24 = arith.constant dense<0.000000e+00> : vector<8x128xf32>
    %26 = tpu.matmul %25, %24, %cst_24 {dimension_numbers = #tpu.dot_dimension_numbers<[1], [0], [0], [1], [0, 0, 1, 1], [], []>} : vector<8x24xbf16>, vector<24x128xbf16>, vector<8x128xf32> -> vector<8x128xf32>
    %c0_25 = arith.constant 0 : index
    %c0_26 = arith.constant 0 : index
    %27 = vector.load %arg7[%c0_25, %c0_26] : memref<8x1xf32, #tpu.memory_space<vmem>>, vector<8x1xf32>
    %28 = vector.broadcast %27 : vector<8x1xf32> to vector<8x128xf32>
    %29 = arith.addf %26, %28 : vector<8x128xf32>
    %c8 = arith.constant 8 : index
    %c0_27 = arith.constant 0 : index
    %30 = vector.load %arg12[%c8, %c0_27] : memref<32x128xf32, #tpu.memory_space<vmem>>, vector<8x128xf32>
    tpu.vector_store %arg12[%c8, %c0_27], %29 {strides = array<i32>} : memref<32x128xf32, #tpu.memory_space<vmem>>, vector<8x128xf32>,
    %cst_28 = arith.constant 0.000000e+00 : f32
    %31 = vector.broadcast %cst_28 : f32 to vector<8x128xf32>
    %32 = arith.maximumf %29, %31 : vector<8x128xf32>
    %c24 = arith.constant 24 : index
    %c0_29 = arith.constant 0 : index
    %33 = vector.load %arg13[%c24, %c0_29] : memref<48x128xf32, #tpu.memory_space<vmem>>, vector<8x128xf32>
    tpu.vector_store %arg13[%c24, %c0_29], %32 {strides = array<i32>} : memref<48x128xf32, #tpu.memory_space<vmem>>, vector<8x128xf32>,
    %c0_30 = arith.constant 0 : index
    %c0_31 = arith.constant 0 : index
    %34 = vector.load %arg13[%c0_30, %c0_31] : memref<48x128xf32, #tpu.memory_space<vmem>>, vector<32x128xf32>
    %35 = arith.truncf %34 : vector<32x128xf32> to vector<32x128xbf16>
    %c0_32 = arith.constant 0 : index
    %c0_33 = arith.constant 0 : index
    %36 = vector.load %arg8[%c0_32, %c0_33] : memref<8x32xbf16, #tpu.memory_space<vmem>>, vector<8x32xbf16>
    %cst_34 = arith.constant dense<0.000000e+00> : vector<8x128xf32>
    %37 = tpu.matmul %36, %35, %cst_34 {dimension_numbers = #tpu.dot_dimension_numbers<[1], [0], [0], [1], [0, 0, 1, 1], [], []>} : vector<8x32xbf16>, vector<32x128xbf16>, vector<8x128xf32> -> vector<8x128xf32>
    %c0_35 = arith.constant 0 : index
    %c0_36 = arith.constant 0 : index
    %38 = vector.load %arg9[%c0_35, %c0_36] : memref<8x1xf32, #tpu.memory_space<vmem>>, vector<8x1xf32>
    %39 = vector.broadcast %38 : vector<8x1xf32> to vector<8x128xf32>
    %40 = arith.addf %37, %39 : vector<8x128xf32>
    %c16_37 = arith.constant 16 : index
    %c0_38 = arith.constant 0 : index
    %41 = vector.load %arg12[%c16_37, %c0_38] : memref<32x128xf32, #tpu.memory_space<vmem>>, vector<8x128xf32>
    tpu.vector_store %arg12[%c16_37, %c0_38], %40 {strides = array<i32>} : memref<32x128xf32, #tpu.memory_space<vmem>>, vector<8x128xf32>,
    %cst_39 = arith.constant 0.000000e+00 : f32
    %42 = vector.broadcast %cst_39 : f32 to vector<8x128xf32>
    %43 = arith.maximumf %40, %42 : vector<8x128xf32>
    %c32 = arith.constant 32 : index
    %c0_40 = arith.constant 0 : index
    %44 = vector.load %arg13[%c32, %c0_40] : memref<48x128xf32, #tpu.memory_space<vmem>>, vector<8x128xf32>
    tpu.vector_store %arg13[%c32, %c0_40], %43 {strides = array<i32>} : memref<48x128xf32, #tpu.memory_space<vmem>>, vector<8x128xf32>,
    %c0_41 = arith.constant 0 : index
    %c0_42 = arith.constant 0 : index
    %45 = vector.load %arg13[%c0_41, %c0_42] : memref<48x128xf32, #tpu.memory_space<vmem>>, vector<40x128xf32>
    %46 = arith.truncf %45 : vector<40x128xf32> to vector<40x128xbf16>
    %c0_43 = arith.constant 0 : index
    %c0_44 = arith.constant 0 : index
    %47 = vector.load %arg10[%c0_43, %c0_44] : memref<8x40xbf16, #tpu.memory_space<vmem>>, vector<8x40xbf16>
    %cst_45 = arith.constant dense<0.000000e+00> : vector<8x128xf32>
    %48 = tpu.matmul %47, %46, %cst_45 {dimension_numbers = #tpu.dot_dimension_numbers<[1], [0], [0], [1], [0, 0, 1, 1], [], []>} : vector<8x40xbf16>, vector<40x128xbf16>, vector<8x128xf32> -> vector<8x128xf32>
    %c0_46 = arith.constant 0 : index
    %c0_47 = arith.constant 0 : index
    %49 = vector.load %arg11[%c0_46, %c0_47] : memref<8x1xf32, #tpu.memory_space<vmem>>, vector<8x1xf32>
    %50 = vector.broadcast %49 : vector<8x1xf32> to vector<8x128xf32>
    %51 = arith.addf %48, %50 : vector<8x128xf32>
    %c24_48 = arith.constant 24 : index
    %c0_49 = arith.constant 0 : index
    %52 = vector.load %arg12[%c24_48, %c0_49] : memref<32x128xf32, #tpu.memory_space<vmem>>, vector<8x128xf32>
    tpu.vector_store %arg12[%c24_48, %c0_49], %51 {strides = array<i32>} : memref<32x128xf32, #tpu.memory_space<vmem>>, vector<8x128xf32>,
    return
  }
  func.func @transform_0(%arg0: i32) -> (i32, i32) {
    %c0_i32 = arith.constant 0 : i32
    %c0_i32_0 = arith.constant 0 : i32
    return %c0_i32, %arg0 : i32, i32
  }
  func.func @transform_1(%arg0: i32) -> (i32, i32) {
    %c0_i32 = arith.constant 0 : i32
    %c0_i32_0 = arith.constant 0 : i32
    %c0_i32_1 = arith.constant 0 : i32
    return %c0_i32, %c0_i32_0 : i32, i32
  }
  func.func @transform_2(%arg0: i32) -> (i32, i32) {
    %c0_i32 = arith.constant 0 : i32
    %c0_i32_0 = arith.constant 0 : i32
    %c0_i32_1 = arith.constant 0 : i32
    return %c0_i32, %c0_i32_0 : i32, i32
  }
  func.func @transform_3(%arg0: i32) -> (i32, i32) {
    %c0_i32 = arith.constant 0 : i32
    %c0_i32_0 = arith.constant 0 : i32
    %c0_i32_1 = arith.constant 0 : i32
    return %c0_i32, %c0_i32_0 : i32, i32
  }
  func.func @transform_4(%arg0: i32) -> (i32, i32) {
    %c0_i32 = arith.constant 0 : i32
    %c0_i32_0 = arith.constant 0 : i32
    %c0_i32_1 = arith.constant 0 : i32
    return %c0_i32, %c0_i32_0 : i32, i32
  }
  func.func @transform_5(%arg0: i32) -> (i32, i32) {
    %c0_i32 = arith.constant 0 : i32
    %c0_i32_0 = arith.constant 0 : i32
    %c0_i32_1 = arith.constant 0 : i32
    return %c0_i32, %c0_i32_0 : i32, i32
  }
  func.func @transform_6(%arg0: i32) -> (i32, i32) {
    %c0_i32 = arith.constant 0 : i32
    %c0_i32_0 = arith.constant 0 : i32
    %c0_i32_1 = arith.constant 0 : i32
    return %c0_i32, %c0_i32_0 : i32, i32
  }
  func.func @transform_7(%arg0: i32) -> (i32, i32) {
    %c0_i32 = arith.constant 0 : i32
    %c0_i32_0 = arith.constant 0 : i32
    %c0_i32_1 = arith.constant 0 : i32
    return %c0_i32, %c0_i32_0 : i32, i32
  }
  func.func @transform_8(%arg0: i32) -> (i32, i32) {
    %c0_i32 = arith.constant 0 : i32
    %c0_i32_0 = arith.constant 0 : i32
    %c0_i32_1 = arith.constant 0 : i32
    return %c0_i32, %c0_i32_0 : i32, i32
  }
  func.func @transform_9(%arg0: i32) -> (i32, i32) {
    %c0_i32 = arith.constant 0 : i32
    %c0_i32_0 = arith.constant 0 : i32
    %c0_i32_1 = arith.constant 0 : i32
    return %c0_i32, %c0_i32_0 : i32, i32
  }
  func.func @transform_10(%arg0: i32) -> (i32, i32) {
    %c0_i32 = arith.constant 0 : i32
    %c0_i32_0 = arith.constant 0 : i32
    %c0_i32_1 = arith.constant 0 : i32
    return %c0_i32, %c0_i32_0 : i32, i32
  }
  func.func @transform_11(%arg0: i32) -> (i32, i32) {
    %c0_i32 = arith.constant 0 : i32
    %c0_i32_0 = arith.constant 0 : i32
    return %c0_i32, %arg0 : i32, i32
  }
}

</mosaic_0001>

<llo_original>
// kernel: tpu_custom_call.1
$region0: #{tpu_custom_call.1}
  #allocation0 [shape = 'u32[]', space=smem, size = 0x4, offset = 0x4, fixed_abs, tag = 'smem constant byte address 0x4 - core index']
  #allocation1 [shape = 'u32[72,128]{1,0:T(1,128)}', space=vmem, size = 0x9000, scoped, tag = 'internal scratch']
  #allocation2 [shape = 'f32[48,128]{1,0:T(8,128)}', space=vmem, size = 0x6000, scoped, tag = 'scratch operand']
  %s0 = inlined_call_operand.vmem [shape: f32[24,128], index: 0, kind: input, shape index: {}]
  %s1 = inlined_call_operand.vmem [shape: bf16[16,24], index: 1, kind: input, shape index: {}]
  %s2 = inlined_call_operand.vmem [shape: f32[16,1], index: 2, kind: input, shape index: {}]
  %s3 = inlined_call_operand.vmem [shape: bf16[8,16], index: 3, kind: input, shape index: {}]
  %s4 = inlined_call_operand.vmem [shape: f32[8,1], index: 4, kind: input, shape index: {}]
  %s5 = inlined_call_operand.vmem [shape: bf16[8,24], index: 5, kind: input, shape index: {}]
  %s6 = inlined_call_operand.vmem [shape: f32[8,1], index: 6, kind: input, shape index: {}]
  %s7 = inlined_call_operand.vmem [shape: bf16[8,32], index: 7, kind: input, shape index: {}]
  %s8 = inlined_call_operand.vmem [shape: f32[8,1], index: 8, kind: input, shape index: {}]
  %s9 = inlined_call_operand.vmem [shape: bf16[8,40], index: 9, kind: input, shape index: {}]
  %s10 = inlined_call_operand.vmem [shape: f32[8,1], index: 10, kind: input, shape index: {}]
  %s11 = inlined_call_operand.hbm [shape: f32[32,128], index: 11, kind: output, shape index: {}]
  %s12 = sld [smem:[#allocation0]]
  $region54: #{tpu_custom_call.1} parent=0
    _
  %s14 = ssub.s32 1, %s12
  %s15 = scalar_select 0, %s14, %s12
  $region1: #{tpu_custom_call.1} parent=0
    #allocation3 [shape = 'u8[16384]{0}', space=vmem, size = 0x4000, scoped, tag = 'output window, operand 0, single buffered']
    #allocation4 [shape = 's32[1]{0}', space=sflag, size = 0x4, scoped, tag = 'scoped memory for tpu_custom_call.1']
    %16 = vsyncpa [#allocation4], 0
    // Predicated region
    $region2: #{tpu_custom_call.1} parent=1 // pred_check
      _
    $region3: #{tpu_custom_call.1} parent=1 // pred_check_branch
      %18 = sbr.rel (0) target = $region5
    $region4: #{tpu_custom_call.1} parent=1 // pred_region
      _
    $region5: #{tpu_custom_call.1} parent=1 // pred_fallthru
      _
    // Predicated region
    $region6: #{tpu_custom_call.1} parent=1 // pred_check
      _
    $region7: #{tpu_custom_call.1} parent=1 // pred_check_branch
      %20 = sbr.rel (0) target = $region9
    $region8: #{tpu_custom_call.1} parent=1 // pred_region
      _
    $region9: #{tpu_custom_call.1} parent=1 // pred_fallthru
      _
    // Predicated region
    $region10: #{tpu_custom_call.1} parent=1 // pred_check
      _
    $region11: #{tpu_custom_call.1} parent=1 // pred_check_branch
      %22 = sbr.rel (0) target = $region13
    $region12: #{tpu_custom_call.1} parent=1 // pred_region
      _
    $region13: #{tpu_custom_call.1} parent=1 // pred_fallthru
      _
    // Predicated region
    $region14: #{tpu_custom_call.1} parent=1 // pred_check
      _
    $region15: #{tpu_custom_call.1} parent=1 // pred_check_branch
      %24 = sbr.rel (0) target = $region17
    $region16: #{tpu_custom_call.1} parent=1 // pred_region
      _
    $region17: #{tpu_custom_call.1} parent=1 // pred_fallthru
      _
    // Predicated region
    $region18: #{tpu_custom_call.1} parent=1 // pred_check
      _
    $region19: #{tpu_custom_call.1} parent=1 // pred_check_branch
      %26 = sbr.rel (0) target = $region21
    $region20: #{tpu_custom_call.1} parent=1 // pred_region
      _
    $region21: #{tpu_custom_call.1} parent=1 // pred_fallthru
      _
    // Predicated region
    $region22: #{tpu_custom_call.1} parent=1 // pred_check
      _
    $region23: #{tpu_custom_call.1} parent=1 // pred_check_branch
      %28 = sbr.rel (0) target = $region25
    $region24: #{tpu_custom_call.1} parent=1 // pred_region
      _
    $region25: #{tpu_custom_call.1} parent=1 // pred_fallthru
      _
    // Predicated region
    $region26: #{tpu_custom_call.1} parent=1 // pred_check
      _
    $region27: #{tpu_custom_call.1} parent=1 // pred_check_branch
      %30 = sbr.rel (0) target = $region29
    $region28: #{tpu_custom_call.1} parent=1 // pred_region
      _
    $region29: #{tpu_custom_call.1} parent=1 // pred_fallthru
      _
    // Predicated region
    $region30: #{tpu_custom_call.1} parent=1 // pred_check
      _
    $region31: #{tpu_custom_call.1} parent=1 // pred_check_branch
      %32 = sbr.rel (0) target = $region33
    $region32: #{tpu_custom_call.1} parent=1 // pred_region
      _
    $region33: #{tpu_custom_call.1} parent=1 // pred_fallthru
      _
    // Predicated region
    $region34: #{tpu_custom_call.1} parent=1 // pred_check
      _
    $region35: #{tpu_custom_call.1} parent=1 // pred_check_branch
      %34 = sbr.rel (0) target = $region37
    $region36: #{tpu_custom_call.1} parent=1 // pred_region
      _
    $region37: #{tpu_custom_call.1} parent=1 // pred_fallthru
      _
    // Predicated region
    $region38: #{tpu_custom_call.1} parent=1 // pred_check
      _
    $region39: #{tpu_custom_call.1} parent=1 // pred_check_branch
      %36 = sbr.rel (0) target = $region41
    $region40: #{tpu_custom_call.1} parent=1 // pred_region
      _
    $region41: #{tpu_custom_call.1} parent=1 // pred_fallthru
      _
    // Predicated region
    $region42: #{tpu_custom_call.1} parent=1 // pred_check
      _
    $region43: #{tpu_custom_call.1} parent=1 // pred_check_branch
      %38 = sbr.rel (0) target = $region45
    $region44: #{tpu_custom_call.1} parent=1 // pred_region
      _
    $region45: #{tpu_custom_call.1} parent=1 // pred_fallthru
      _
    %v40 = vld [vmem:[%s0] sm:$0xff]
    %v41 = vld [vmem:[%s0 + $0x8] sm:$0xff]
    %v42 = vld [vmem:[%s0 + $0x10] sm:$0xff]
    %v43 = vmax.f32 %v40, 0.0
    %v44 = vmax.f32 %v41, 0.0
    %v45 = vmax.f32 %v42, 0.0
    %v46 = vpack.c.bf16 %v44, %v43
    %v47 = vpack.c.bf16 %v45, %v45
    %v48 = vld [vmem:[%s1] sm:$0xf]
    %v49 = vld [vmem:[%s1 + $0x4] sm:$0xf]
    %v50 = vld [vmem:[%s2] sm:$0xff]
    %v51 = vld [vmem:[%s2 + $0x8] sm:$0xff]
    %53 = vset.pattern.permute.xlu0 0
    %54 = vperm.xlu0 %53, %v50
    %v55 = vpop.permute.xlu0 %54
    %58 = vset.pattern.permute.xlu0 0
    %59 = vperm.xlu0 %58, %v51
    %v60 = vpop.permute.xlu0 %59
    %v64 = vunpack.c.l.b16 %v48
    %v65 = vunpack.c.l.b16 %v49
    %v66 = vpack.c.b16 %v65, %v64
    %vm67 = vcmask 195584
    %v69 = vsel %vm67, %v66, 0
    %vm71 = vcmask 1043456
    %v73 = vsel %vm71, %v47, 0
    %75 = vmatpush.bf16.msra.mxu0 0
    %76 = vmatpush.bf16.msra.mxu0 0
    %77 = vmatpush.bf16.msra.mxu0 0
    %78 = vmatpush.bf16.msra.mxu0 0
    %79 = vmatpush.bf16.msra.mxu0 0
    %80 = vmatpush.bf16.msra.mxu0 0
    %81 = vmatpush.bf16.msra.mxu0 %v73
    %82 = vmatpush.bf16.msra.mxu0 %v46
    %83 = vmatmul.bf16.gmra.mxu0 %v69
    %v84 = vpop.f32.mrf.mxu0
    %v85 = vadd.f32 %v55, %v84
    %v86 = vpop.f32.mrf.mxu0
    %v87 = vadd.f32 %v60, %v86
    %88 = vdwg.mxu0
    %v89 = vmax.f32 %v85, 0.0
    %v90 = vmax.f32 %v87, 0.0
    %91 = vst [vmem:[#allocation2] sm:$0xff] %v89
    %92 = vst [vmem:[#allocation2 + $0x8] sm:$0xff] %v90
    %v93 = vld [vmem:[#allocation2] sm:$0xff]
    %v94 = vld [vmem:[#allocation2 + $0x8] sm:$0xff]
    %v95 = vpack.c.bf16 %v94, %v93
    %v96 = vld [vmem:[%s3] sm:$0xf]
    %v97 = vld [vmem:[%s4] sm:$0xff]
    %99 = vset.pattern.permute.xlu0 0
    %100 = vperm.xlu0 %99, %v97
    %v101 = vpop.permute.xlu0 %100
    %vm103 = vcmask 130048
    %v105 = vsel %vm103, %v96, 0
    %107 = vmatpush.bf16.msra.mxu0 0
    %108 = vmatpush.bf16.msra.mxu0 0
    %109 = vmatpush.bf16.msra.mxu0 0
    %110 = vmatpush.bf16.msra.mxu0 0
    %111 = vmatpush.bf16.msra.mxu0 0
    %112 = vmatpush.bf16.msra.mxu0 0
    %113 = vmatpush.bf16.msra.mxu0 0
    %114 = vmatpush.bf16.msra.mxu0 %v95
    %115 = vmatmul.bf16.gmra.mxu0 %v105
    %v116 = vpop.f32.mrf.mxu0
    %v117 = vadd.f32 %v101, %v116
    %v118 = vpop.f32.mrf.mxu0
    %119 = vdwg.mxu0
    %120 = vst [vmem:[#allocation3] sm:$0xff] %v117
    %v121 = vmax.f32 %v117, 0.0
    %122 = vst [vmem:[#allocation2 + $0x10] sm:$0xff] %v121
    %v123 = vld [vmem:[#allocation2] sm:$0xff]
    %v124 = vld [vmem:[#allocation2 + $0x8] sm:$0xff]
    %v125 = vld [vmem:[#allocation2 + $0x10] sm:$0xff]
    %v126 = vpack.c.bf16 %v124, %v123
    %v127 = vpack.c.bf16 %v125, %v125
    %v128 = vld [vmem:[%s5] sm:$0xf]
    %v129 = vld [vmem:[%s6] sm:$0xff]
    %131 = vset.pattern.permute.xlu0 0
    %132 = vperm.xlu0 %131, %v129
    %v133 = vpop.permute.xlu0 %132
    %v136 = vsel %vm67, %v128, 0
    %v139 = vsel %vm71, %v127, 0
    %141 = vmatpush.bf16.msra.mxu0 0
    %142 = vmatpush.bf16.msra.mxu0 0
    %143 = vmatpush.bf16.msra.mxu0 0
    %144 = vmatpush.bf16.msra.mxu0 0
    %145 = vmatpush.bf16.msra.mxu0 0
    %146 = vmatpush.bf16.msra.mxu0 0
    %147 = vmatpush.bf16.msra.mxu0 %v139
    %148 = vmatpush.bf16.msra.mxu0 %v126
    %149 = vmatmul.bf16.gmra.mxu0 %v136
    %v150 = vpop.f32.mrf.mxu0
    %v151 = vadd.f32 %v133, %v150
    %v152 = vpop.f32.mrf.mxu0
    %153 = vdwg.mxu0
    %154 = vst [vmem:[#allocation3 + $0x8] sm:$0xff] %v151
    %v155 = vmax.f32 %v151, 0.0
    %156 = vst [vmem:[#allocation2 + $0x18] sm:$0xff] %v155
    %v157 = vld [vmem:[#allocation2] sm:$0xff]
    %v158 = vld [vmem:[#allocation2 + $0x8] sm:$0xff]
    %v159 = vld [vmem:[#allocation2 + $0x10] sm:$0xff]
    %v160 = vld [vmem:[#allocation2 + $0x18] sm:$0xff]
    %v161 = vpack.c.bf16 %v158, %v157
    %v162 = vpack.c.bf16 %v160, %v159
    %v163 = vld [vmem:[%s7] sm:$0xf]
    %v164 = vld [vmem:[%s8] sm:$0xff]
    %166 = vset.pattern.permute.xlu0 0
    %167 = vperm.xlu0 %166, %v164
    %v168 = vpop.permute.xlu0 %167
    %vm170 = vcmask 261120
    %v172 = vsel %vm170, %v163, 0
    %174 = vmatpush.bf16.msra.mxu0 0
    %175 = vmatpush.bf16.msra.mxu0 0
    %176 = vmatpush.bf16.msra.mxu0 0
    %177 = vmatpush.bf16.msra.mxu0 0
    %178 = vmatpush.bf16.msra.mxu0 0
    %179 = vmatpush.bf16.msra.mxu0 0
    %180 = vmatpush.bf16.msra.mxu0 %v162
    %181 = vmatpush.bf16.msra.mxu0 %v161
    %182 = vmatmul.bf16.gmra.mxu0 %v172
    %v183 = vpop.f32.mrf.mxu0
    %v184 = vadd.f32 %v168, %v183
    %v185 = vpop.f32.mrf.mxu0
    %186 = vdwg.mxu0
    %187 = vst [vmem:[#allocation3 + $0x10] sm:$0xff] %v184
    %v188 = vmax.f32 %v184, 0.0
    %189 = vst [vmem:[#allocation2 + $0x20] sm:$0xff] %v188
    %v190 = vld [vmem:[#allocation2] sm:$0xff]
    %v191 = vld [vmem:[#allocation2 + $0x8] sm:$0xff]
    %v192 = vld [vmem:[#allocation2 + $0x10] sm:$0xff]
    %v193 = vld [vmem:[#allocation2 + $0x18] sm:$0xff]
    %v194 = vld [vmem:[#allocation2 + $0x20] sm:$0xff]
    %v195 = vpack.c.bf16 %v191, %v190
    %v196 = vpack.c.bf16 %v193, %v192
    %v197 = vpack.c.bf16 %v194, %v194
    %v198 = vld [vmem:[%s9] sm:$0xf]
    %v199 = vld [vmem:[%s10] sm:$0xff]
    %201 = vset.pattern.permute.xlu0 0
    %202 = vperm.xlu0 %201, %v199
    %v203 = vpop.permute.xlu0 %202
    %vm205 = vcmask 326656
    %v207 = vsel %vm205, %v198, 0
    %v210 = vsel %vm71, %v197, 0
    %212 = vmatpush.bf16.msra.mxu0 0
    %213 = vmatpush.bf16.msra.mxu0 0
    %214 = vmatpush.bf16.msra.mxu0 0
    %215 = vmatpush.bf16.msra.mxu0 0
    %216 = vmatpush.bf16.msra.mxu0 0
    %217 = vmatpush.bf16.msra.mxu0 %v210
    %218 = vmatpush.bf16.msra.mxu0 %v196
    %219 = vmatpush.bf16.msra.mxu0 %v195
    %220 = vmatmul.bf16.gmra.mxu0 %v207
    %v221 = vpop.f32.mrf.mxu0
    %v222 = vadd.f32 %v203, %v221
    %v223 = vpop.f32.mrf.mxu0
    %224 = vdwg.mxu0
    %225 = vst [vmem:[#allocation3 + $0x18] sm:$0xff] %v222
    // Predicated region
    $region46: #{tpu_custom_call.1} parent=1 // pred_check
      _
    $region47: #{tpu_custom_call.1} parent=1 // pred_check_branch
      %227 = sbr.rel (0) target = $region49
    $region48: #{tpu_custom_call.1} parent=1 // pred_region
      %229 = vsyncadd [#allocation4], 0
      %s230 = sshll.u32 [#allocation3], 4
      %s231 = int_to_ptr.vmem [resolvable:$true] %s230
      %s232 = sshll.u32 %s11, 4
      %s233 = int_to_ptr.hbm [resolvable:$true] %s232
      %238 = dma.vmem_to_hbm [thread:$0]  %s231, 512, %s233, [#allocation4], 128, 128, 8
    $region49: #{tpu_custom_call.1} parent=1 // pred_fallthru
      _
    // Predicated region
    $region50: #{tpu_custom_call.1} parent=1 // pred_check
      _
    $region51: #{tpu_custom_call.1} parent=1 // pred_check_branch
      %240 = sbr.rel (0) target = $region53
    $region52: #{tpu_custom_call.1} parent=1 // pred_region
      %242 = dma.done [#allocation4], 512
    $region53: #{tpu_custom_call.1} parent=1 // pred_fallthru
      _
    %243 = vsyncpa [#allocation4], 1

</llo_original>
